<compile_context>
chip_gen: v6e
topology: v6e:2x2x1
jax: 0.10.0
libtpu: 0.0.40
codegen_flags: <defaults>
</compile_context>

<pallas_src>
import functools

import jax
import jax.numpy as jnp
from jax.experimental import pallas as pl
from jax.experimental.pallas import tpu as pltpu


def _round_up(x, m):
    return ((x + m - 1) // m) * m


# ----------------------------------------------------------------------------
# Kernel
# ----------------------------------------------------------------------------
def mixer_kernel(qs_ref, state_ref,
                 w_hyp_ref, b_hyp_ref,   # compacted hypernet: (S, NH), (1, NH)
                 w_mix_ref,              # mixing layer 1 (+ hyper_b1 fold): (Kp, NH)
                 wb2b_ref,               # hyper_b2[2] row (+ bb2b lane): (1, NH)
                 out_ref,                # (TB, 1)
                 *, n_agents, k_pad, mxu_dtype):
    state = state_ref[...]                               # (TB, S) f32
    qs = qs_ref[...]                                     # (TB, A) f32
    tb = qs.shape[0]
    A = n_agents
    S = state.shape[-1]

    # f32 path: force the accurate multi-pass MXU decomposition for validation.
    prec = jax.lax.Precision.HIGHEST if mxu_dtype == jnp.float32 else None

    # --- Compacted hypernet matmul: ONE 128-lane MXU N-group. ----------------
    #   lanes [0, H)   : w2      = state @ w2h  + b2h
    #   lanes [H, 2H)  : hb2_pre = state @ wb2a + bb2a
    #   lane  2H       : always-one lane (weight column 0, bias 1) -> carries bb2b
    #   lanes (2H, NH) : zero
    hyp = jnp.dot(state.astype(mxu_dtype), w_hyp_ref[...].astype(mxu_dtype),
                  preferred_element_type=jnp.float32,
                  precision=prec) + b_hyp_ref[...]       # (TB, NH) f32

    # --- Mixing layer 1 as one MXU matmul (hyper_w1 + hyper_b1 + biases). ----
    # x_mix = [ state*qs_0 | ... | state*qs_{A-1} | qs | state | 1 ... 1 ]
    # The trailing ones block pads K to a multiple of 8; only its first column
    # meets a nonzero W_mix row (bb1), the rest meet zero rows.
    k_tail = k_pad - (A * S + A + S)
    x_mix = jnp.concatenate(
        [state * qs[:, a:a + 1] for a in range(A)]
        + [qs, state, jnp.ones((tb, k_tail), jnp.float32)], axis=-1)  # (TB, Kp)
    hidden = jnp.maximum(
        jnp.dot(x_mix.astype(mxu_dtype), w_mix_ref[...].astype(mxu_dtype),
                preferred_element_type=jnp.float32, precision=prec),
        0.0)                                             # (TB, NH); lanes >= H are 0

    # --- Mixing layer 2 + b2 head: VPU FMA + a single cross-lane reduction. --
    y = jnp.sum(hidden * hyp + jnp.maximum(hyp, 0.0) * wb2b_ref[...],
                axis=-1, keepdims=True)                  # (TB, 1)
    out_ref[...] = y


# ----------------------------------------------------------------------------
# Wrapper
# ----------------------------------------------------------------------------
def _choose_batch_tile(bs, batch_tile):
    """Tiny batches: one full-batch block (block == full dim exemption).
    Otherwise: a multiple of 8, chosen so the grid has >= 2 steps (lets
    "parallel" semantics use both v7x TensorCores), capped by batch_tile."""
    if bs <= 8:
        return bs
    return min(batch_tile, _round_up(pl.cdiv(bs, 2), 8))


def mixer_forward(agent_qs, state, prepared, *, n_agents,
                  batch_tile=2048, mxu_dtype=jnp.bfloat16):
    """Fused MixerNet forward.

    batch_tile must be a multiple of 8.  2048-4096 amortizes the ~0.35 us
    per-grid-step pipeline overhead; if you raise it past ~4096, set
    pltpu.CompilerParams(vmem_limit_bytes=...) explicitly (v7x headroom).
    """
    assert batch_tile % 8 == 0
    w_hyp, b_hyp, w_mix, wb2b_row = prepared

    bs, A = agent_qs.shape
    S = state.shape[-1]
    assert A == n_agents
    NH = w_hyp.shape[1]          # compacted hypernet width (128 for H=32)
    Kp = w_mix.shape[0]          # padded mixing-matmul K (88 for A=4, S=16)

    tb = _choose_batch_tile(bs, batch_tile)
    grid = (pl.cdiv(bs, tb),)

    kernel = functools.partial(mixer_kernel, n_agents=n_agents, k_pad=Kp,
                               mxu_dtype=mxu_dtype)

    flops = (2 * bs * S * NH          # compacted hypernet matmul
             + 2 * bs * Kp * NH       # mixing matmul
             + 4 * bs * NH)           # elementwise epilogue + reduction
    bytes_accessed = 4 * (bs * (A + S + 1)
                          + w_hyp.size + b_hyp.size + w_mix.size + wb2b_row.size)

    return pl.pallas_call(
        kernel,
        out_shape=jax.ShapeDtypeStruct((bs, 1), jnp.float32),
        grid=grid,
        in_specs=[
            pl.BlockSpec((tb, A), lambda i: (i, 0)),        # agent_qs tile
            pl.BlockSpec((tb, S), lambda i: (i, 0)),        # state tile
            pl.BlockSpec(w_hyp.shape, lambda i: (0, 0)),    # weights stay VMEM-resident
            pl.BlockSpec(b_hyp.shape, lambda i: (0, 0)),
            pl.BlockSpec(w_mix.shape, lambda i: (0, 0)),
            pl.BlockSpec(wb2b_row.shape, lambda i: (0, 0)),
        ],
        out_specs=pl.BlockSpec((tb, 1), lambda i: (i, 0)),
        compiler_params=pltpu.CompilerParams(
            dimension_semantics=("parallel",)),
        cost_estimate=pl.CostEstimate(
            flops=flops, transcendentals=0, bytes_accessed=bytes_accessed),
    )(agent_qs, state, w_hyp, b_hyp, w_mix, wb2b_row)


# ----------------------------------------------------------------------------
# Parameter handling
# ----------------------------------------------------------------------------
def init_params(key, n_agents, state_dim, hidden_dim):
    """PyTorch-Linear-style uniform init; weights stored (in, out), biases (1, out)."""
    def linear(key, fan_in, fan_out):
        kw, kb = jax.random.split(key)
        bound = 1.0 / jnp.sqrt(float(fan_in))
        w = jax.random.uniform(kw, (fan_in, fan_out), jnp.float32, -bound, bound)
        b = jax.random.uniform(kb, (1, fan_out), jnp.float32, -bound, bound)
        return w, b

    k1, k2, k3, k4, k5 = jax.random.split(key, 5)
    w1h, b1h = linear(k1, state_dim, n_agents * hidden_dim)   # hyper_w1
    wb1, bb1 = linear(k2, state_dim, hidden_dim)              # hyper_b1
    w2h, b2h = linear(k3, state_dim, hidden_dim)              # hyper_w2
    wb2a, bb2a = linear(k4, state_dim, hidden_dim)            # hyper_b2[0]
    wb2b, bb2b = linear(k5, hidden_dim, 1)                    # hyper_b2[2]
    return (w1h, b1h, wb1, bb1, w2h, b2h, wb2a, bb2a, wb2b, bb2b)


def prepare_params(params, *, n_agents, state_dim, hidden_dim):
    """Fuse/pad the hypernetwork parameters into the kernel's weight layout."""
    (w1h, b1h, wb1, bb1, w2h, b2h, wb2a, bb2a, wb2b, bb2b) = params
    A, S, H = n_agents, state_dim, hidden_dim
    NH = _round_up(2 * H + 1, 128)            # single compacted hypernet segment
    Kp = _round_up(A * S + A + S + 1, 8)      # mixing-matmul K, 8-aligned

    def pad_cols(x, width):
        return jnp.pad(x, ((0, 0), (0, width - x.shape[1])))

    # Hypernet -> [ w2 | hb2_pre | ones-lane | 0 ... ]
    w_hyp = pad_cols(jnp.concatenate([w2h, wb2a], axis=1), NH)      # (S, NH)
    b_hyp = pad_cols(jnp.concatenate([b2h, bb2a], axis=1), NH)      # (1, NH)
    b_hyp = b_hyp.at[0, 2 * H].set(1.0)   # weight column is zero -> lane == 1 always

    # Mixing weight for x_mix = [state (x) qs | qs | state | 1 ...]:
    #   rows a*S+s       : hyper_w1 weight    rows A*S+a   : hyper_w1 bias
    #   rows A*S+A+s     : hyper_b1 weight    row  A*S+A+S : hyper_b1 bias
    # Columns >= H are zero-padded so hidden lanes >= H are structurally zero.
    w1r = w1h.reshape(S, A, H).transpose(1, 0, 2).reshape(A * S, H)
    b1r = b1h.reshape(A, H)
    w_mix = jnp.concatenate([w1r, b1r, wb1, bb1], axis=0)           # (A*S+A+S+1, H)
    w_mix = jnp.pad(w_mix, ((0, Kp - w_mix.shape[0]), (0, NH - H)))  # (Kp, NH)

    # hyper_b2[2] as a lane-aligned row: wb2b at lanes [H, 2H), bb2b at lane 2H.
    wb2b_row = jnp.zeros((1, NH), jnp.float32)
    wb2b_row = wb2b_row.at[0, H:2 * H].set(wb2b[:, 0])
    wb2b_row = wb2b_row.at[0, 2 * H].set(bb2b[0, 0])

    return w_hyp, b_hyp, w_mix, wb2b_row


# ----------------------------------------------------------------------------
# Pure-JAX reference (mirrors the PyTorch forward, full-precision matmuls)
# ----------------------------------------------------------------------------
def mixer_reference(agent_qs, state, params, *, n_agents, hidden_dim):
    (w1h, b1h, wb1, bb1, w2h, b2h, wb2a, bb2a, wb2b, bb2b) = params
    hi = jax.lax.Precision.HIGHEST
    bs = agent_qs.shape[0]
    w1 = (jnp.dot(state, w1h, precision=hi) + b1h).reshape(bs, n_agents, hidden_dim)
    b1 = (jnp.dot(state, wb1, precision=hi) + bb1).reshape(bs, 1, hidden_dim)
    hidden = jnp.einsum('bka,bah->bkh', agent_qs.reshape(bs, 1, n_agents), w1,
                        precision=hi) + b1
    hidden = jnp.maximum(hidden, 0.0)
    w2 = (jnp.dot(state, w2h, precision=hi) + b2h).reshape(bs, hidden_dim, 1)
    b2 = (jnp.dot(jnp.maximum(jnp.dot(state, wb2a, precision=hi) + bb2a, 0.0),
                  wb2b, precision=hi) + bb2b).reshape(bs, 1, 1)
    y = jnp.einsum('bkh,bho->bko', hidden, w2, precision=hi) + b2
    return y.reshape(-1, 1)


if __name__ == "__main__":
    n_agents = 4
    state_dim = 16
    hidden_dim = 32

    key = jax.random.PRNGKey(0)
    k_p, k_qs, k_st, k_qs2, k_st2 = jax.random.split(key, 5)
    params = init_params(k_p, n_agents, state_dim, hidden_dim)
    prepared = prepare_params(params, n_agents=n_agents,
                              state_dim=state_dim, hidden_dim=hidden_dim)

    # --- Small batch (single full-batch block). ------------------------------
    bs = 2
    agent_qs = jax.random.normal(k_qs, (bs, n_agents), jnp.float32)
    state = jax.random.normal(k_st, (bs, state_dim), jnp.float32)
    ref = mixer_reference(agent_qs, state, params,
                          n_agents=n_agents, hidden_dim=hidden_dim)

    out_f32 = jax.block_until_ready(
        mixer_forward(agent_qs, state, prepared, n_agents=n_agents,
                      mxu_dtype=jnp.float32))
    assert out_f32.shape == (bs, 1)
    assert jnp.allclose(out_f32, ref, atol=5e-3, rtol=5e-3), (out_f32, ref)

    out_bf16 = jax.block_until_ready(
        mixer_forward(agent_qs, state, prepared, n_agents=n_agents))
    assert jnp.allclose(out_bf16, ref, atol=2e-1, rtol=5e-2), (out_bf16, ref)

    # --- Larger ragged batch: grid > 1, boundary block masked by Pallas. -----
    bs2 = 5000
    agent_qs2 = jax.random.normal(k_qs2, (bs2, n_agents), jnp.float32)
    state2 = jax.random.normal(k_st2, (bs2, state_dim), jnp.float32)
    ref2 = mixer_reference(agent_qs2, state2, params,
                           n_agents=n_agents, hidden_dim=hidden_dim)

    out2_f32 = jax.block_until_ready(
        mixer_forward(agent_qs2, state2, prepared, n_agents=n_agents,
                      batch_tile=2048, mxu_dtype=jnp.float32))
    assert out2_f32.shape == (bs2, 1)
    assert jnp.allclose(out2_f32, ref2, atol=5e-3, rtol=5e-3), "ragged f32 mismatch"

    out2_bf16 = jax.block_until_ready(
        mixer_forward(agent_qs2, state2, prepared, n_agents=n_agents,
                      batch_tile=2048))
    assert jnp.allclose(out2_bf16, ref2, atol=2e-1, rtol=5e-2), "ragged bf16 mismatch"

    print("KERNEL_OK")
</pallas_src>

<mosaic_0001>
module attributes {stable_mosaic.version = 11 : i64} {
  func.func @mixer_kernel(%arg0: i32, %arg1: memref<2x4xf32, #tpu.memory_space<vmem>>, %arg2: memref<2x16xf32, #tpu.memory_space<vmem>>, %arg3: memref<16x128xf32, #tpu.memory_space<vmem>>, %arg4: memref<1x128xf32, #tpu.memory_space<vmem>>, %arg5: memref<88x128xf32, #tpu.memory_space<vmem>>, %arg6: memref<1x128xf32, #tpu.memory_space<vmem>>, %arg7: memref<2x1xf32, #tpu.memory_space<vmem>>) attributes {dimension_semantics = [#tpu.dimension_semantics<parallel>], iteration_bounds = array<i64: 1>, scalar_prefetch = 0 : i64, scratch_operands = 0 : i64, tpu.core_type = #tpu.core_type<tc>, window_params = [{transform_indices = @transform_0, window_bounds = array<i64: 2, 4>}, {transform_indices = @transform_1, window_bounds = array<i64: 2, 16>}, {pipeline_mode = #tpu.pipeline_mode<synchronous>, transform_indices = @transform_2, window_bounds = array<i64: 16, 128>}, {pipeline_mode = #tpu.pipeline_mode<synchronous>, transform_indices = @transform_3, window_bounds = array<i64: 1, 128>}, {pipeline_mode = #tpu.pipeline_mode<synchronous>, transform_indices = @transform_4, window_bounds = array<i64: 88, 128>}, {pipeline_mode = #tpu.pipeline_mode<synchronous>, transform_indices = @transform_5, window_bounds = array<i64: 1, 128>}, {transform_indices = @transform_6, window_bounds = array<i64: 2, 1>}]} {
    %c0 = arith.constant 0 : index
    %c0_0 = arith.constant 0 : index
    %0 = vector.load %arg2[%c0, %c0_0] : memref<2x16xf32, #tpu.memory_space<vmem>>, vector<2x16xf32>
    %c0_1 = arith.constant 0 : index
    %c0_2 = arith.constant 0 : index
    %1 = vector.load %arg1[%c0_1, %c0_2] : memref<2x4xf32, #tpu.memory_space<vmem>>, vector<2x4xf32>
    %c0_3 = arith.constant 0 : index
    %c0_4 = arith.constant 0 : index
    %2 = vector.load %arg3[%c0_3, %c0_4] : memref<16x128xf32, #tpu.memory_space<vmem>>, vector<16x128xf32>
    %cst = arith.constant dense<0.000000e+00> : vector<2x128xf32>
    %3 = tpu.matmul %0, %2, %cst {dimension_numbers = #tpu.dot_dimension_numbers<[1], [0], [0], [1], [0, 0, 1, 1], [], []>, precision = #tpu.contract_precision<fp32>} : vector<2x16xf32>, vector<16x128xf32>, vector<2x128xf32> -> vector<2x128xf32>
    %c0_5 = arith.constant 0 : index
    %c0_6 = arith.constant 0 : index
    %4 = vector.load %arg4[%c0_5, %c0_6] : memref<1x128xf32, #tpu.memory_space<vmem>>, vector<1x128xf32>
    %5 = vector.broadcast %4 : vector<1x128xf32> to vector<2x128xf32>
    %6 = arith.addf %3, %5 : vector<2x128xf32>
    %7 = vector.extract_strided_slice %1 {offsets = [0, 0], sizes = [2, 1], strides = [1, 1]} : vector<2x4xf32> to vector<2x1xf32>
    %8 = vector.broadcast %7 : vector<2x1xf32> to vector<2x16xf32>
    %9 = arith.mulf %0, %8 : vector<2x16xf32>
    %10 = vector.extract_strided_slice %1 {offsets = [0, 1], sizes = [2, 1], strides = [1, 1]} : vector<2x4xf32> to vector<2x1xf32>
    %11 = vector.broadcast %10 : vector<2x1xf32> to vector<2x16xf32>
    %12 = arith.mulf %0, %11 : vector<2x16xf32>
    %13 = vector.extract_strided_slice %1 {offsets = [0, 2], sizes = [2, 1], strides = [1, 1]} : vector<2x4xf32> to vector<2x1xf32>
    %14 = vector.broadcast %13 : vector<2x1xf32> to vector<2x16xf32>
    %15 = arith.mulf %0, %14 : vector<2x16xf32>
    %16 = vector.extract_strided_slice %1 {offsets = [0, 3], sizes = [2, 1], strides = [1, 1]} : vector<2x4xf32> to vector<2x1xf32>
    %17 = vector.broadcast %16 : vector<2x1xf32> to vector<2x16xf32>
    %18 = arith.mulf %0, %17 : vector<2x16xf32>
    %cst_7 = arith.constant 1.000000e+00 : f32
    %19 = vector.broadcast %cst_7 : f32 to vector<2x4xf32>
    %20 = tpu.concatenate %9, %12, %15, %18, %1, %0, %19 in 1 : vector<2x16xf32>, vector<2x16xf32>, vector<2x16xf32>, vector<2x16xf32>, vector<2x4xf32>, vector<2x16xf32>, vector<2x4xf32> -> vector<2x88xf32>
    %c0_8 = arith.constant 0 : index
    %c0_9 = arith.constant 0 : index
    %21 = vector.load %arg5[%c0_8, %c0_9] : memref<88x128xf32, #tpu.memory_space<vmem>>, vector<88x128xf32>
    %cst_10 = arith.constant dense<0.000000e+00> : vector<2x128xf32>
    %22 = tpu.matmul %20, %21, %cst_10 {dimension_numbers = #tpu.dot_dimension_numbers<[1], [0], [0], [1], [0, 0, 1, 1], [], []>, precision = #tpu.contract_precision<fp32>} : vector<2x88xf32>, vector<88x128xf32>, vector<2x128xf32> -> vector<2x128xf32>
    %cst_11 = arith.constant 0.000000e+00 : f32
    %23 = vector.broadcast %cst_11 : f32 to vector<2x128xf32>
    %24 = arith.maximumf %22, %23 : vector<2x128xf32>
    %25 = arith.mulf %24, %6 : vector<2x128xf32>
    %cst_12 = arith.constant 0.000000e+00 : f32
    %26 = vector.broadcast %cst_12 : f32 to vector<2x128xf32>
    %27 = arith.maximumf %6, %26 : vector<2x128xf32>
    %c0_13 = arith.constant 0 : index
    %c0_14 = arith.constant 0 : index
    %28 = vector.load %arg6[%c0_13, %c0_14] : memref<1x128xf32, #tpu.memory_space<vmem>>, vector<1x128xf32>
    %29 = vector.broadcast %28 : vector<1x128xf32> to vector<2x128xf32>
    %30 = arith.mulf %27, %29 : vector<2x128xf32>
    %31 = arith.addf %25, %30 : vector<2x128xf32>
    %cst_15 = arith.constant dense<0.000000e+00> : vector<2xf32>
    %32 = vector.multi_reduction <add>, %31, %cst_15 [1] : vector<2x128xf32> to vector<2xf32>
    %33 = vector.shape_cast %32 : vector<2xf32> to vector<2x1xf32>
    %c0_16 = arith.constant 0 : index
    %c0_17 = arith.constant 0 : index
    %34 = vector.load %arg7[%c0_16, %c0_17] : memref<2x1xf32, #tpu.memory_space<vmem>>, vector<2x1xf32>
    tpu.vector_store %arg7[%c0_16, %c0_17], %33 {strides = array<i32>} : memref<2x1xf32, #tpu.memory_space<vmem>>, vector<2x1xf32>,
    return
  }
  func.func @transform_0(%arg0: i32) -> (i32, i32) {
    %c0_i32 = arith.constant 0 : i32
    %c0_i32_0 = arith.constant 0 : i32
    return %arg0, %c0_i32 : i32, i32
  }
  func.func @transform_1(%arg0: i32) -> (i32, i32) {
    %c0_i32 = arith.constant 0 : i32
    %c0_i32_0 = arith.constant 0 : i32
    return %arg0, %c0_i32 : i32, i32
  }
  func.func @transform_2(%arg0: i32) -> (i32, i32) {
    %c0_i32 = arith.constant 0 : i32
    %c0_i32_0 = arith.constant 0 : i32
    %c0_i32_1 = arith.constant 0 : i32
    return %c0_i32, %c0_i32_0 : i32, i32
  }
  func.func @transform_3(%arg0: i32) -> (i32, i32) {
    %c0_i32 = arith.constant 0 : i32
    %c0_i32_0 = arith.constant 0 : i32
    %c0_i32_1 = arith.constant 0 : i32
    return %c0_i32, %c0_i32_0 : i32, i32
  }
  func.func @transform_4(%arg0: i32) -> (i32, i32) {
    %c0_i32 = arith.constant 0 : i32
    %c0_i32_0 = arith.constant 0 : i32
    %c0_i32_1 = arith.constant 0 : i32
    return %c0_i32, %c0_i32_0 : i32, i32
  }
  func.func @transform_5(%arg0: i32) -> (i32, i32) {
    %c0_i32 = arith.constant 0 : i32
    %c0_i32_0 = arith.constant 0 : i32
    %c0_i32_1 = arith.constant 0 : i32
    return %c0_i32, %c0_i32_0 : i32, i32
  }
  func.func @transform_6(%arg0: i32) -> (i32, i32) {
    %c0_i32 = arith.constant 0 : i32
    %c0_i32_0 = arith.constant 0 : i32
    return %arg0, %c0_i32 : i32, i32
  }
}

</mosaic_0001>

<llo_original>
// kernel: tpu_custom_call.1
$region0: #{tpu_custom_call.1}
  #allocation0 [shape = 'u32[]', space=smem, size = 0x4, offset = 0x4, fixed_abs, tag = 'smem constant byte address 0x4 - core index']
  #allocation1 [shape = 'u32[144,128]{1,0:T(1,128)}', space=vmem, size = 0x12000, scoped, tag = 'internal scratch']
  %s0 = inlined_call_operand.hbm [shape: f32[2,4], index: 0, kind: input, shape index: {}]
  %s1 = inlined_call_operand.hbm [shape: f32[2,16], index: 1, kind: input, shape index: {}]
  %s2 = inlined_call_operand.hbm [shape: f32[16,128], index: 2, kind: input, shape index: {}]
  %s3 = inlined_call_operand.vmem [shape: f32[1,128], index: 3, kind: input, shape index: {}]
  %s4 = inlined_call_operand.hbm [shape: f32[88,128], index: 4, kind: input, shape index: {}]
  %s5 = inlined_call_operand.vmem [shape: f32[1,128], index: 5, kind: input, shape index: {}]
  %s6 = inlined_call_operand.vmem [shape: f32[2,1], index: 6, kind: output, shape index: {}]
  %s7 = sld [smem:[#allocation0]]
  $region50: #{tpu_custom_call.1} parent=0
    _
  %s9 = ssub.s32 1, %s7
  %s10 = scalar_select 0, %s9, %s7
  $region1: #{tpu_custom_call.1} parent=0
    #allocation2 [shape = 'u8[1024]{0}', space=vmem, size = 0x400, scoped, tag = 'input window, operand 0, single buffered']
    #allocation3 [shape = 's32[1]{0}', space=sflag, size = 0x4, scoped, tag = 'scoped memory for tpu_custom_call.1']
    #allocation4 [shape = 'u8[1024]{0}', space=vmem, size = 0x400, scoped, tag = 'input window, operand 1, single buffered']
    #allocation5 [shape = 's32[1]{0}', space=sflag, size = 0x4, scoped, tag = 'scoped memory for tpu_custom_call.1']
    #allocation6 [shape = 'u8[8192]{0}', space=vmem, size = 0x2000, scoped, tag = 'input window, operand 2, single buffered']
    #allocation7 [shape = 'u8[45056]{0}', space=vmem, size = 0xb000, scoped, tag = 'input window, operand 4, single buffered']
    #allocation8 [shape = 's32[1]{0}', space=sflag, size = 0x4, scoped, tag = 'scoped memory for tpu_custom_call.1']
    %11 = vsyncpa [#allocation3], 0
    %12 = vsyncpa [#allocation5], 0
    %13 = vsyncpa [#allocation8], 0
    // Predicated region
    $region2: #{tpu_custom_call.1} parent=1 // pred_check
      _
    $region3: #{tpu_custom_call.1} parent=1 // pred_check_branch
      %15 = sbr.rel (0) target = $region5
    $region4: #{tpu_custom_call.1} parent=1 // pred_region
      %s17 = ssub.s32 32, 32
      %18 = vsyncadd [#allocation3], %s17
      %s20 = sshll.u32 [#allocation2], 4
      %s21 = int_to_ptr.vmem [resolvable:$true] %s20
      %23 = dma.hbm_to_vmem [thread:$0]  %s0, 32, %s21, [#allocation3]
    $region5: #{tpu_custom_call.1} parent=1 // pred_fallthru
      _
    // Predicated region
    $region6: #{tpu_custom_call.1} parent=1 // pred_check
      _
    $region7: #{tpu_custom_call.1} parent=1 // pred_check_branch
      %25 = sbr.rel (0) target = $region9
    $region8: #{tpu_custom_call.1} parent=1 // pred_region
      %s27 = ssub.s32 32, 32
      %28 = vsyncadd [#allocation5], %s27
      %s30 = sshll.u32 [#allocation4], 4
      %s31 = int_to_ptr.vmem [resolvable:$true] %s30
      %33 = dma.hbm_to_vmem [thread:$0]  %s1, 32, %s31, [#allocation5]
    $region9: #{tpu_custom_call.1} parent=1 // pred_fallthru
      _
    // Predicated region
    $region10: #{tpu_custom_call.1} parent=1 // pred_check
      _
    $region11: #{tpu_custom_call.1} parent=1 // pred_check_branch
      %35 = sbr.rel (0) target = $region13
    $region12: #{tpu_custom_call.1} parent=1 // pred_region
      %s37 = ssub.s32 256, 256
      %38 = vsyncadd [#allocation5], %s37
      %s39 = sshll.u32 [#allocation6], 4
      %s40 = int_to_ptr.vmem [resolvable:$true] %s39
      %45 = dma.hbm_to_vmem [thread:$0]  %s2, 256, %s40, [#allocation5], 128, 128, 8
    $region13: #{tpu_custom_call.1} parent=1 // pred_fallthru
      _
    // Predicated region
    $region14: #{tpu_custom_call.1} parent=1 // pred_check
      _
    $region15: #{tpu_custom_call.1} parent=1 // pred_check_branch
      %47 = sbr.rel (0) target = $region17
    $region16: #{tpu_custom_call.1} parent=1 // pred_region
      _
    $region17: #{tpu_custom_call.1} parent=1 // pred_fallthru
      _
    // Predicated region
    $region18: #{tpu_custom_call.1} parent=1 // pred_check
      _
    $region19: #{tpu_custom_call.1} parent=1 // pred_check_branch
      %49 = sbr.rel (0) target = $region21
    $region20: #{tpu_custom_call.1} parent=1 // pred_region
      %s51 = ssub.s32 1408, 1408
      %52 = vsyncadd [#allocation8], %s51
      %s53 = sshll.u32 [#allocation7], 4
      %s54 = int_to_ptr.vmem [resolvable:$true] %s53
      %59 = dma.hbm_to_vmem [thread:$0]  %s4, 1408, %s54, [#allocation8], 128, 128, 8
    $region21: #{tpu_custom_call.1} parent=1 // pred_fallthru
      _
    // Predicated region
    $region22: #{tpu_custom_call.1} parent=1 // pred_check
      _
    $region23: #{tpu_custom_call.1} parent=1 // pred_check_branch
      %61 = sbr.rel (0) target = $region25
    $region24: #{tpu_custom_call.1} parent=1 // pred_region
      _
    $region25: #{tpu_custom_call.1} parent=1 // pred_fallthru
      _
    // Predicated region
    $region26: #{tpu_custom_call.1} parent=1 // pred_check
      _
    $region27: #{tpu_custom_call.1} parent=1 // pred_check_branch
      %63 = sbr.rel (0) target = $region29
    $region28: #{tpu_custom_call.1} parent=1 // pred_region
      %64 = dma.done [#allocation3], 32
    $region29: #{tpu_custom_call.1} parent=1 // pred_fallthru
      _
    // Predicated region
    $region30: #{tpu_custom_call.1} parent=1 // pred_check
      _
    $region31: #{tpu_custom_call.1} parent=1 // pred_check_branch
      %66 = sbr.rel (0) target = $region33
    $region32: #{tpu_custom_call.1} parent=1 // pred_region
      %67 = dma.done [#allocation5], 32
    $region33: #{tpu_custom_call.1} parent=1 // pred_fallthru
      _
    // Predicated region
    $region34: #{tpu_custom_call.1} parent=1 // pred_check
      _
    $region35: #{tpu_custom_call.1} parent=1 // pred_check_branch
      %69 = sbr.rel (0) target = $region37
    $region36: #{tpu_custom_call.1} parent=1 // pred_region
      %70 = dma.done [#allocation5], 256
    $region37: #{tpu_custom_call.1} parent=1 // pred_fallthru
      _
    // Predicated region
    $region38: #{tpu_custom_call.1} parent=1 // pred_check
      _
    $region39: #{tpu_custom_call.1} parent=1 // pred_check_branch
      %72 = sbr.rel (0) target = $region41
    $region40: #{tpu_custom_call.1} parent=1 // pred_region
      %73 = dma.done [#allocation8], 1408
    $region41: #{tpu_custom_call.1} parent=1 // pred_fallthru
      _
    %v74 = vld [vmem:[#allocation4] sm:$0x3]
    %v75 = vld [vmem:[#allocation2] sm:$0x3]
    %v76 = vld [vmem:[#allocation6] sm:$0xff]
    %v77 = vld [vmem:[#allocation6 + $0x8] sm:$0xff]
    %v78 = vld [vmem:[%s3] sm:$0x1]
    %v80 = vlaneseq
    %v81 = vshrl.u32 %v80, 7
    %v82 = vsub.s32 0, %v81
    %v83 = vrot.slane %v78, %v82
    %vm85 = vcmask 130048
    %v87 = vsel %vm85, %v74, 0
    %89 = vmatprep.subr.mxu0 0.0
    %90 = vmatpush1.msra.mxu0 0.0
    %91 = vmatprep.subr.mxu0 0.0
    %92 = vmatpush1.msra.mxu0 0.0
    %93 = vmatprep.subr.mxu0 0.0
    %94 = vmatpush1.msra.mxu0 0.0
    %95 = vmatprep.subr.mxu0 0.0
    %96 = vmatpush1.msra.mxu0 0.0
    %97 = vmatprep.subr.mxu0 0.0
    %98 = vmatpush1.msra.mxu0 0.0
    %99 = vmatprep.subr.mxu0 0.0
    %100 = vmatpush1.msra.mxu0 0.0
    %101 = vmatprep.subr.mxu0 0.0
    %102 = vmatpush1.msra.mxu0 0.0
    %103 = vmatprep.subr.mxu0 0.0
    %104 = vmatpush1.msra.mxu0 0.0
    %105 = vmatprep.subr.mxu0 0.0
    %106 = vmatpush1.msra.mxu0 0.0
    %107 = vmatprep.subr.mxu0 0.0
    %108 = vmatpush1.msra.mxu0 0.0
    %109 = vmatprep.subr.mxu0 0.0
    %110 = vmatpush1.msra.mxu0 0.0
    %111 = vmatprep.subr.mxu0 0.0
    %112 = vmatpush1.msra.mxu0 0.0
    %113 = vmatprep.subr.mxu0 0.0
    %114 = vmatpush1.msra.mxu0 0.0
    %115 = vmatprep.subr.mxu0 0.0
    %116 = vmatpush1.msra.mxu0 0.0
    %117 = vmatprep.subr.mxu0 0.0
    %v118 = vand.u32 %v77, 4294901760
    %119 = vmatpush1.msra.mxu0 %v118
    %120 = vmatprep.subr.mxu0 0.0
    %v121 = vand.u32 %v76, 4294901760
    %122 = vmatpush1.msra.mxu0 %v121
    %123 = vmatprep.subr.mxu0 0.0
    %124 = vmatpush2.msra.mxu0 0.0
    %125 = vmatprep.subr.mxu0 0.0
    %126 = vmatpush2.msra.mxu0 0.0
    %127 = vmatprep.subr.mxu0 0.0
    %128 = vmatpush2.msra.mxu0 0.0
    %129 = vmatprep.subr.mxu0 0.0
    %130 = vmatpush2.msra.mxu0 0.0
    %131 = vmatprep.subr.mxu0 0.0
    %132 = vmatpush2.msra.mxu0 0.0
    %133 = vmatprep.subr.mxu0 0.0
    %134 = vmatpush2.msra.mxu0 0.0
    %135 = vmatprep.subr.mxu0 0.0
    %136 = vmatpush2.msra.mxu0 0.0
    %137 = vmatprep.subr.mxu0 0.0
    %138 = vmatpush2.msra.mxu0 0.0
    %139 = vmatprep.subr.mxu0 0.0
    %140 = vmatpush2.msra.mxu0 0.0
    %141 = vmatprep.subr.mxu0 0.0
    %142 = vmatpush2.msra.mxu0 0.0
    %143 = vmatprep.subr.mxu0 0.0
    %144 = vmatpush2.msra.mxu0 0.0
    %145 = vmatprep.subr.mxu0 0.0
    %146 = vmatpush2.msra.mxu0 0.0
    %147 = vmatprep.subr.mxu0 0.0
    %148 = vmatpush2.msra.mxu0 0.0
    %149 = vmatprep.subr.mxu0 0.0
    %150 = vmatpush2.msra.mxu0 0.0
    %151 = vmatprep.subr.mxu0 0.0
    %152 = vmatpush2.msra.mxu0 0.0
    %153 = vmatprep.subr.mxu0 0.0
    %154 = vmatpush2.msra.mxu0 0.0
    %155 = vmatprep.mubr.f32.mxu0 0.0
    %v156 = vand.u32 %v87, 4294901760
    %v157 = vsub.f32 %v87, %v156
    %v158 = vand.u32 %v157, 4294901760
    %v159 = vsub.f32 %v157, %v158
    %v160 = vand.u32 %v159, 4294901760
    %161 = vmatmul.mubr.f32.gmra.mxu0 %v160
    %v162 = vpop.f32.mrf.mxu0
    %v163 = vadd.f32 %v83, %v162
    %v164 = vpop.f32.mrf.mxu0
    %165 = vdwg.mxu0
    %166 = vmatprep.subr.mxu0 0.0
    %167 = vmatpush1.msra.mxu0 0.0
    %168 = vmatprep.subr.mxu0 0.0
    %169 = vmatpush1.msra.mxu0 0.0
    %170 = vmatprep.subr.mxu0 0.0
    %171 = vmatpush1.msra.mxu0 0.0
    %172 = vmatprep.subr.mxu0 0.0
    %173 = vmatpush1.msra.mxu0 0.0
    %174 = vmatprep.subr.mxu0 0.0
    %175 = vmatpush1.msra.mxu0 0.0
    %176 = vmatprep.subr.mxu0 0.0
    %177 = vmatpush1.msra.mxu0 0.0
    %178 = vmatprep.subr.mxu0 0.0
    %179 = vmatpush1.msra.mxu0 0.0
    %180 = vmatprep.subr.mxu0 0.0
    %181 = vmatpush1.msra.mxu0 0.0
    %182 = vmatprep.subr.mxu0 0.0
    %183 = vmatpush1.msra.mxu0 0.0
    %184 = vmatprep.subr.mxu0 0.0
    %185 = vmatpush1.msra.mxu0 0.0
    %186 = vmatprep.subr.mxu0 0.0
    %187 = vmatpush1.msra.mxu0 0.0
    %188 = vmatprep.subr.mxu0 0.0
    %189 = vmatpush1.msra.mxu0 0.0
    %190 = vmatprep.subr.mxu0 0.0
    %191 = vmatpush1.msra.mxu0 0.0
    %192 = vmatprep.subr.mxu0 0.0
    %193 = vmatpush1.msra.mxu0 0.0
    %194 = vmatprep.subr.mxu0 0.0
    %v195 = vand.u32 %v77, 4294901760
    %v196 = vsub.f32 %v77, %v195
    %v197 = vand.u32 %v196, 4294901760
    %v198 = vsub.f32 %v196, %v197
    %v199 = vand.u32 %v198, 4294901760
    %200 = vmatpush1.msra.mxu0 %v199
    %201 = vmatprep.subr.mxu0 0.0
    %v202 = vand.u32 %v76, 4294901760
    %v203 = vsub.f32 %v76, %v202
    %v204 = vand.u32 %v203, 4294901760
    %v205 = vsub.f32 %v203, %v204
    %v206 = vand.u32 %v205, 4294901760
    %207 = vmatpush1.msra.mxu0 %v206
    %208 = vmatprep.subr.mxu0 0.0
    %209 = vmatpush2.msra.mxu0 0.0
    %210 = vmatprep.subr.mxu0 0.0
    %211 = vmatpush2.msra.mxu0 0.0
    %212 = vmatprep.subr.mxu0 0.0
    %213 = vmatpush2.msra.mxu0 0.0
    %214 = vmatprep.subr.mxu0 0.0
    %215 = vmatpush2.msra.mxu0 0.0
    %216 = vmatprep.subr.mxu0 0.0
    %217 = vmatpush2.msra.mxu0 0.0
    %218 = vmatprep.subr.mxu0 0.0
    %219 = vmatpush2.msra.mxu0 0.0
    %220 = vmatprep.subr.mxu0 0.0
    %221 = vmatpush2.msra.mxu0 0.0
    %222 = vmatprep.subr.mxu0 0.0
    %223 = vmatpush2.msra.mxu0 0.0
    %224 = vmatprep.subr.mxu0 0.0
    %225 = vmatpush2.msra.mxu0 0.0
    %226 = vmatprep.subr.mxu0 0.0
    %227 = vmatpush2.msra.mxu0 0.0
    %228 = vmatprep.subr.mxu0 0.0
    %229 = vmatpush2.msra.mxu0 0.0
    %230 = vmatprep.subr.mxu0 0.0
    %231 = vmatpush2.msra.mxu0 0.0
    %232 = vmatprep.subr.mxu0 0.0
    %233 = vmatpush2.msra.mxu0 0.0
    %234 = vmatprep.subr.mxu0 0.0
    %235 = vmatpush2.msra.mxu0 0.0
    %236 = vmatprep.subr.mxu0 0.0
    %237 = vmatpush2.msra.mxu0 0.0
    %238 = vmatprep.subr.mxu0 0.0
    %239 = vmatpush2.msra.mxu0 0.0
    %240 = vmatprep.mubr.f32.mxu0 0.0
    %v241 = vand.u32 %v87, 4294901760
    %242 = vmatmul.mubr.f32.gmra.mxu0 %v241
    %v243 = vpop.f32.mrf.mxu0
    %v244 = vadd.f32 %v163, %v243
    %v245 = vpop.f32.mrf.mxu0
    %246 = vdwg.mxu0
    %247 = vmatprep.subr.mxu0 0.0
    %248 = vmatpush1.msra.mxu0 0.0
    %249 = vmatprep.subr.mxu0 0.0
    %250 = vmatpush1.msra.mxu0 0.0
    %251 = vmatprep.subr.mxu0 0.0
    %252 = vmatpush1.msra.mxu0 0.0
    %253 = vmatprep.subr.mxu0 0.0
    %254 = vmatpush1.msra.mxu0 0.0
    %255 = vmatprep.subr.mxu0 0.0
    %256 = vmatpush1.msra.mxu0 0.0
    %257 = vmatprep.subr.mxu0 0.0
    %258 = vmatpush1.msra.mxu0 0.0
    %259 = vmatprep.subr.mxu0 0.0
    %260 = vmatpush1.msra.mxu0 0.0
    %261 = vmatprep.subr.mxu0 0.0
    %262 = vmatpush1.msra.mxu0 0.0
    %263 = vmatprep.subr.mxu0 0.0
    %264 = vmatpush1.msra.mxu0 0.0
    %265 = vmatprep.subr.mxu0 0.0
    %266 = vmatpush1.msra.mxu0 0.0
    %267 = vmatprep.subr.mxu0 0.0
    %268 = vmatpush1.msra.mxu0 0.0
    %269 = vmatprep.subr.mxu0 0.0
    %270 = vmatpush1.msra.mxu0 0.0
    %271 = vmatprep.subr.mxu0 0.0
    %272 = vmatpush1.msra.mxu0 0.0
    %273 = vmatprep.subr.mxu0 0.0
    %274 = vmatpush1.msra.mxu0 0.0
    %275 = vmatprep.subr.mxu0 0.0
    %v276 = vand.u32 %v77, 4294901760
    %v277 = vsub.f32 %v77, %v276
    %278 = vmatpush1.msra.mxu0 %v277
    %279 = vmatprep.subr.mxu0 0.0
    %v280 = vand.u32 %v76, 4294901760
    %v281 = vsub.f32 %v76, %v280
    %282 = vmatpush1.msra.mxu0 %v281
    %283 = vmatprep.subr.mxu0 0.0
    %284 = vmatpush2.msra.mxu0 0.0
    %285 = vmatprep.subr.mxu0 0.0
    %286 = vmatpush2.msra.mxu0 0.0
    %287 = vmatprep.subr.mxu0 0.0
    %288 = vmatpush2.msra.mxu0 0.0
    %289 = vmatprep.subr.mxu0 0.0
    %290 = vmatpush2.msra.mxu0 0.0
    %291 = vmatprep.subr.mxu0 0.0
    %292 = vmatpush2.msra.mxu0 0.0
    %293 = vmatprep.subr.mxu0 0.0
    %294 = vmatpush2.msra.mxu0 0.0
    %295 = vmatprep.subr.mxu0 0.0
    %296 = vmatpush2.msra.mxu0 0.0
    %297 = vmatprep.subr.mxu0 0.0
    %298 = vmatpush2.msra.mxu0 0.0
    %299 = vmatprep.subr.mxu0 0.0
    %300 = vmatpush2.msra.mxu0 0.0
    %301 = vmatprep.subr.mxu0 0.0
    %302 = vmatpush2.msra.mxu0 0.0
    %303 = vmatprep.subr.mxu0 0.0
    %304 = vmatpush2.msra.mxu0 0.0
    %305 = vmatprep.subr.mxu0 0.0
    %306 = vmatpush2.msra.mxu0 0.0
    %307 = vmatprep.subr.mxu0 0.0
    %308 = vmatpush2.msra.mxu0 0.0
    %309 = vmatprep.subr.mxu0 0.0
    %310 = vmatpush2.msra.mxu0 0.0
    %311 = vmatprep.subr.mxu0 0.0
    %312 = vmatpush2.msra.mxu0 0.0
    %313 = vmatprep.subr.mxu0 0.0
    %314 = vmatpush2.msra.mxu0 0.0
    %315 = vmatprep.mubr.f32.mxu0 0.0
    %v316 = vand.u32 %v87, 4294901760
    %v317 = vsub.f32 %v87, %v316
    %318 = vmatmul.mubr.f32.gmra.mxu0 %v317
    %v319 = vpop.f32.mrf.mxu0
    %v320 = vadd.f32 %v244, %v319
    %v321 = vpop.f32.mrf.mxu0
    %322 = vdwg.mxu0
    %323 = vmatprep.subr.mxu0 0.0
    %324 = vmatpush1.msra.mxu0 0.0
    %325 = vmatprep.subr.mxu0 0.0
    %326 = vmatpush1.msra.mxu0 0.0
    %327 = vmatprep.subr.mxu0 0.0
    %328 = vmatpush1.msra.mxu0 0.0
    %329 = vmatprep.subr.mxu0 0.0
    %330 = vmatpush1.msra.mxu0 0.0
    %331 = vmatprep.subr.mxu0 0.0
    %332 = vmatpush1.msra.mxu0 0.0
    %333 = vmatprep.subr.mxu0 0.0
    %334 = vmatpush1.msra.mxu0 0.0
    %335 = vmatprep.subr.mxu0 0.0
    %336 = vmatpush1.msra.mxu0 0.0
    %337 = vmatprep.subr.mxu0 0.0
    %338 = vmatpush1.msra.mxu0 0.0
    %339 = vmatprep.subr.mxu0 0.0
    %340 = vmatpush1.msra.mxu0 0.0
    %341 = vmatprep.subr.mxu0 0.0
    %342 = vmatpush1.msra.mxu0 0.0
    %343 = vmatprep.subr.mxu0 0.0
    %344 = vmatpush1.msra.mxu0 0.0
    %345 = vmatprep.subr.mxu0 0.0
    %346 = vmatpush1.msra.mxu0 0.0
    %347 = vmatprep.subr.mxu0 0.0
    %348 = vmatpush1.msra.mxu0 0.0
    %349 = vmatprep.subr.mxu0 0.0
    %350 = vmatpush1.msra.mxu0 0.0
    %351 = vmatprep.subr.mxu0 0.0
    %v352 = vand.u32 %v77, 4294901760
    %353 = vmatpush1.msra.mxu0 %v352
    %354 = vmatprep.subr.mxu0 0.0
    %v355 = vand.u32 %v76, 4294901760
    %356 = vmatpush1.msra.mxu0 %v355
    %357 = vmatprep.subr.mxu0 0.0
    %358 = vmatpush2.msra.mxu0 0.0
    %359 = vmatprep.subr.mxu0 0.0
    %360 = vmatpush2.msra.mxu0 0.0
    %361 = vmatprep.subr.mxu0 0.0
    %362 = vmatpush2.msra.mxu0 0.0
    %363 = vmatprep.subr.mxu0 0.0
    %364 = vmatpush2.msra.mxu0 0.0
    %365 = vmatprep.subr.mxu0 0.0
    %366 = vmatpush2.msra.mxu0 0.0
    %367 = vmatprep.subr.mxu0 0.0
    %368 = vmatpush2.msra.mxu0 0.0
    %369 = vmatprep.subr.mxu0 0.0
    %370 = vmatpush2.msra.mxu0 0.0
    %371 = vmatprep.subr.mxu0 0.0
    %372 = vmatpush2.msra.mxu0 0.0
    %373 = vmatprep.subr.mxu0 0.0
    %374 = vmatpush2.msra.mxu0 0.0
    %375 = vmatprep.subr.mxu0 0.0
    %376 = vmatpush2.msra.mxu0 0.0
    %377 = vmatprep.subr.mxu0 0.0
    %378 = vmatpush2.msra.mxu0 0.0
    %379 = vmatprep.subr.mxu0 0.0
    %380 = vmatpush2.msra.mxu0 0.0
    %381 = vmatprep.subr.mxu0 0.0
    %382 = vmatpush2.msra.mxu0 0.0
    %383 = vmatprep.subr.mxu0 0.0
    %384 = vmatpush2.msra.mxu0 0.0
    %385 = vmatprep.subr.mxu0 0.0
    %386 = vmatpush2.msra.mxu0 0.0
    %387 = vmatprep.subr.mxu0 0.0
    %388 = vmatpush2.msra.mxu0 0.0
    %389 = vmatprep.mubr.f32.mxu0 0.0
    %v390 = vand.u32 %v87, 4294901760
    %v391 = vsub.f32 %v87, %v390
    %v392 = vand.u32 %v391, 4294901760
    %393 = vmatmul.mubr.f32.gmra.mxu0 %v392
    %v394 = vpop.f32.mrf.mxu0
    %v395 = vadd.f32 %v320, %v394
    %v396 = vpop.f32.mrf.mxu0
    %397 = vdwg.mxu0
    %398 = vmatprep.subr.mxu0 0.0
    %399 = vmatpush1.msra.mxu0 0.0
    %400 = vmatprep.subr.mxu0 0.0
    %401 = vmatpush1.msra.mxu0 0.0
    %402 = vmatprep.subr.mxu0 0.0
    %403 = vmatpush1.msra.mxu0 0.0
    %404 = vmatprep.subr.mxu0 0.0
    %405 = vmatpush1.msra.mxu0 0.0
    %406 = vmatprep.subr.mxu0 0.0
    %407 = vmatpush1.msra.mxu0 0.0
    %408 = vmatprep.subr.mxu0 0.0
    %409 = vmatpush1.msra.mxu0 0.0
    %410 = vmatprep.subr.mxu0 0.0
    %411 = vmatpush1.msra.mxu0 0.0
    %412 = vmatprep.subr.mxu0 0.0
    %413 = vmatpush1.msra.mxu0 0.0
    %414 = vmatprep.subr.mxu0 0.0
    %415 = vmatpush1.msra.mxu0 0.0
    %416 = vmatprep.subr.mxu0 0.0
    %417 = vmatpush1.msra.mxu0 0.0
    %418 = vmatprep.subr.mxu0 0.0
    %419 = vmatpush1.msra.mxu0 0.0
    %420 = vmatprep.subr.mxu0 0.0
    %421 = vmatpush1.msra.mxu0 0.0
    %422 = vmatprep.subr.mxu0 0.0
    %423 = vmatpush1.msra.mxu0 0.0
    %424 = vmatprep.subr.mxu0 0.0
    %425 = vmatpush1.msra.mxu0 0.0
    %426 = vmatprep.subr.mxu0 0.0
    %v427 = vand.u32 %v77, 4294901760
    %v428 = vsub.f32 %v77, %v427
    %v429 = vand.u32 %v428, 4294901760
    %430 = vmatpush1.msra.mxu0 %v429
    %431 = vmatprep.subr.mxu0 0.0
    %v432 = vand.u32 %v76, 4294901760
    %v433 = vsub.f32 %v76, %v432
    %v434 = vand.u32 %v433, 4294901760
    %435 = vmatpush1.msra.mxu0 %v434
    %436 = vmatprep.subr.mxu0 0.0
    %437 = vmatpush2.msra.mxu0 0.0
    %438 = vmatprep.subr.mxu0 0.0
    %439 = vmatpush2.msra.mxu0 0.0
    %440 = vmatprep.subr.mxu0 0.0
    %441 = vmatpush2.msra.mxu0 0.0
    %442 = vmatprep.subr.mxu0 0.0
    %443 = vmatpush2.msra.mxu0 0.0
    %444 = vmatprep.subr.mxu0 0.0
    %445 = vmatpush2.msra.mxu0 0.0
    %446 = vmatprep.subr.mxu0 0.0
    %447 = vmatpush2.msra.mxu0 0.0
    %448 = vmatprep.subr.mxu0 0.0
    %449 = vmatpush2.msra.mxu0 0.0
    %450 = vmatprep.subr.mxu0 0.0
    %451 = vmatpush2.msra.mxu0 0.0
    %452 = vmatprep.subr.mxu0 0.0
    %453 = vmatpush2.msra.mxu0 0.0
    %454 = vmatprep.subr.mxu0 0.0
    %455 = vmatpush2.msra.mxu0 0.0
    %456 = vmatprep.subr.mxu0 0.0
    %457 = vmatpush2.msra.mxu0 0.0
    %458 = vmatprep.subr.mxu0 0.0
    %459 = vmatpush2.msra.mxu0 0.0
    %460 = vmatprep.subr.mxu0 0.0
    %461 = vmatpush2.msra.mxu0 0.0
    %462 = vmatprep.subr.mxu0 0.0
    %463 = vmatpush2.msra.mxu0 0.0
    %464 = vmatprep.subr.mxu0 0.0
    %465 = vmatpush2.msra.mxu0 0.0
    %466 = vmatprep.subr.mxu0 0.0
    %467 = vmatpush2.msra.mxu0 0.0
    %468 = vmatprep.mubr.f32.mxu0 0.0
    %v469 = vand.u32 %v87, 4294901760
    %470 = vmatmul.mubr.f32.gmra.mxu0 %v469
    %v471 = vpop.f32.mrf.mxu0
    %v472 = vadd.f32 %v395, %v471
    %v473 = vpop.f32.mrf.mxu0
    %474 = vdwg.mxu0
    %475 = vmatprep.subr.mxu0 0.0
    %476 = vmatpush1.msra.mxu0 0.0
    %477 = vmatprep.subr.mxu0 0.0
    %478 = vmatpush1.msra.mxu0 0.0
    %479 = vmatprep.subr.mxu0 0.0
    %480 = vmatpush1.msra.mxu0 0.0
    %481 = vmatprep.subr.mxu0 0.0
    %482 = vmatpush1.msra.mxu0 0.0
    %483 = vmatprep.subr.mxu0 0.0
    %484 = vmatpush1.msra.mxu0 0.0
    %485 = vmatprep.subr.mxu0 0.0
    %486 = vmatpush1.msra.mxu0 0.0
    %487 = vmatprep.subr.mxu0 0.0
    %488 = vmatpush1.msra.mxu0 0.0
    %489 = vmatprep.subr.mxu0 0.0
    %490 = vmatpush1.msra.mxu0 0.0
    %491 = vmatprep.subr.mxu0 0.0
    %492 = vmatpush1.msra.mxu0 0.0
    %493 = vmatprep.subr.mxu0 0.0
    %494 = vmatpush1.msra.mxu0 0.0
    %495 = vmatprep.subr.mxu0 0.0
    %496 = vmatpush1.msra.mxu0 0.0
    %497 = vmatprep.subr.mxu0 0.0
    %498 = vmatpush1.msra.mxu0 0.0
    %499 = vmatprep.subr.mxu0 0.0
    %500 = vmatpush1.msra.mxu0 0.0
    %501 = vmatprep.subr.mxu0 0.0
    %502 = vmatpush1.msra.mxu0 0.0
    %503 = vmatprep.subr.mxu0 0.0
    %v504 = vand.u32 %v77, 4294901760
    %505 = vmatpush1.msra.mxu0 %v504
    %506 = vmatprep.subr.mxu0 0.0
    %v507 = vand.u32 %v76, 4294901760
    %508 = vmatpush1.msra.mxu0 %v507
    %509 = vmatprep.subr.mxu0 0.0
    %510 = vmatpush2.msra.mxu0 0.0
    %511 = vmatprep.subr.mxu0 0.0
    %512 = vmatpush2.msra.mxu0 0.0
    %513 = vmatprep.subr.mxu0 0.0
    %514 = vmatpush2.msra.mxu0 0.0
    %515 = vmatprep.subr.mxu0 0.0
    %516 = vmatpush2.msra.mxu0 0.0
    %517 = vmatprep.subr.mxu0 0.0
    %518 = vmatpush2.msra.mxu0 0.0
    %519 = vmatprep.subr.mxu0 0.0
    %520 = vmatpush2.msra.mxu0 0.0
    %521 = vmatprep.subr.mxu0 0.0
    %522 = vmatpush2.msra.mxu0 0.0
    %523 = vmatprep.subr.mxu0 0.0
    %524 = vmatpush2.msra.mxu0 0.0
    %525 = vmatprep.subr.mxu0 0.0
    %526 = vmatpush2.msra.mxu0 0.0
    %527 = vmatprep.subr.mxu0 0.0
    %528 = vmatpush2.msra.mxu0 0.0
    %529 = vmatprep.subr.mxu0 0.0
    %530 = vmatpush2.msra.mxu0 0.0
    %531 = vmatprep.subr.mxu0 0.0
    %532 = vmatpush2.msra.mxu0 0.0
    %533 = vmatprep.subr.mxu0 0.0
    %534 = vmatpush2.msra.mxu0 0.0
    %535 = vmatprep.subr.mxu0 0.0
    %536 = vmatpush2.msra.mxu0 0.0
    %537 = vmatprep.subr.mxu0 0.0
    %538 = vmatpush2.msra.mxu0 0.0
    %539 = vmatprep.subr.mxu0 0.0
    %540 = vmatpush2.msra.mxu0 0.0
    %541 = vmatprep.mubr.f32.mxu0 0.0
    %v542 = vand.u32 %v87, 4294901760
    %543 = vmatmul.mubr.f32.gmra.mxu0 %v542
    %v544 = vpop.f32.mrf.mxu0
    %v545 = vadd.f32 %v472, %v544
    %v546 = vpop.f32.mrf.mxu0
    %547 = vdwg.mxu0
    %549 = vset.pattern.permute.xlu0 0
    %550 = vperm.xlu0 %549, %v75
    %v551 = vpop.permute.xlu0 %550
    %v553 = vmul.f32 %v74, %v551
    %554 = vset.pattern.permute.xlu0 1
    %555 = vperm.xlu0 %554, %v75
    %v556 = vpop.permute.xlu0 %555
    %v558 = vmul.f32 %v74, %v556
    %559 = vset.pattern.permute.xlu0 2
    %560 = vperm.xlu0 %559, %v75
    %v561 = vpop.permute.xlu0 %560
    %v563 = vmul.f32 %v74, %v561
    %564 = vset.pattern.permute.xlu0 3
    %565 = vperm.xlu0 %564, %v75
    %v566 = vpop.permute.xlu0 %565
    %v568 = vmul.f32 %v74, %v566
    %570 = vrot.lane.b32.xlu0 %v558, 16
    %v571 = vpop.permute.xlu0 %570
    %574 = vrot.lane.b32.xlu0 %v563, 32
    %v575 = vpop.permute.xlu0 %574
    %578 = vrot.lane.b32.xlu0 %v568, 48
    %v579 = vpop.permute.xlu0 %578
    %581 = vrot.lane.b32.xlu0 %v75, 64
    %v582 = vpop.permute.xlu0 %581
    %584 = vrot.lane.b32.xlu0 %v74, 68
    %v585 = vpop.permute.xlu0 %584
    %v587 = vsel %vm85, %v553, %v571
    %vm588 = vcmask 261120
    %v589 = vsel %vm588, %v587, %v575
    %vm590 = vcmask 392192
    %v591 = vsel %vm590, %v589, %v579
    %vm592 = vcmask 523264
    %v593 = vsel %vm592, %v591, %v582
    %vm594 = vcmask 556032
    %v595 = vsel %vm594, %v593, %v585
    %vm596 = vcmask 687104
    %v597 = vsel %vm596, %v595, 1.0
    %v598 = vld [vmem:[#allocation7] sm:$0xff]
    %v599 = vld [vmem:[#allocation7 + $0x8] sm:$0xff]
    %v600 = vld [vmem:[#allocation7 + $0x10] sm:$0xff]
    %v601 = vld [vmem:[#allocation7 + $0x18] sm:$0xff]
    %v602 = vld [vmem:[#allocation7 + $0x20] sm:$0xff]
    %v603 = vld [vmem:[#allocation7 + $0x28] sm:$0xff]
    %v604 = vld [vmem:[#allocation7 + $0x30] sm:$0xff]
    %v605 = vld [vmem:[#allocation7 + $0x38] sm:$0xff]
    %v606 = vld [vmem:[#allocation7 + $0x40] sm:$0xff]
    %v607 = vld [vmem:[#allocation7 + $0x48] sm:$0xff]
    %v608 = vld [vmem:[#allocation7 + $0x50] sm:$0xff]
    %vm609 = vcmask 719872
    %v611 = vsel %vm609, %v597, 0
    %613 = vmatprep.subr.mxu0 0.0
    %614 = vmatpush1.msra.mxu0 0.0
    %615 = vmatprep.subr.mxu0 0.0
    %616 = vmatpush1.msra.mxu0 0.0
    %617 = vmatprep.subr.mxu0 0.0
    %618 = vmatpush1.msra.mxu0 0.0
    %619 = vmatprep.subr.mxu0 0.0
    %620 = vmatpush1.msra.mxu0 0.0
    %621 = vmatprep.subr.mxu0 0.0
    %622 = vmatpush1.msra.mxu0 0.0
    %623 = vmatprep.subr.mxu0 0.0
    %v624 = vand.u32 %v608, 4294901760
    %625 = vmatpush1.msra.mxu0 %v624
    %626 = vmatprep.subr.mxu0 0.0
    %v627 = vand.u32 %v607, 4294901760
    %628 = vmatpush1.msra.mxu0 %v627
    %629 = vmatprep.subr.mxu0 0.0
    %v630 = vand.u32 %v606, 4294901760
    %631 = vmatpush1.msra.mxu0 %v630
    %632 = vmatprep.subr.mxu0 0.0
    %v633 = vand.u32 %v605, 4294901760
    %634 = vmatpush1.msra.mxu0 %v633
    %635 = vmatprep.subr.mxu0 0.0
    %v636 = vand.u32 %v604, 4294901760
    %637 = vmatpush1.msra.mxu0 %v636
    %638 = vmatprep.subr.mxu0 0.0
    %v639 = vand.u32 %v603, 4294901760
    %640 = vmatpush1.msra.mxu0 %v639
    %641 = vmatprep.subr.mxu0 0.0
    %v642 = vand.u32 %v602, 4294901760
    %643 = vmatpush1.msra.mxu0 %v642
    %644 = vmatprep.subr.mxu0 0.0
    %v645 = vand.u32 %v601, 4294901760
    %646 = vmatpush1.msra.mxu0 %v645
    %647 = vmatprep.subr.mxu0 0.0
    %v648 = vand.u32 %v600, 4294901760
    %649 = vmatpush1.msra.mxu0 %v648
    %650 = vmatprep.subr.mxu0 0.0
    %v651 = vand.u32 %v599, 4294901760
    %652 = vmatpush1.msra.mxu0 %v651
    %653 = vmatprep.subr.mxu0 0.0
    %v654 = vand.u32 %v598, 4294901760
    %655 = vmatpush1.msra.mxu0 %v654
    %656 = vmatprep.subr.mxu0 0.0
    %657 = vmatpush2.msra.mxu0 0.0
    %658 = vmatprep.subr.mxu0 0.0
    %659 = vmatpush2.msra.mxu0 0.0
    %660 = vmatprep.subr.mxu0 0.0
    %661 = vmatpush2.msra.mxu0 0.0
    %662 = vmatprep.subr.mxu0 0.0
    %663 = vmatpush2.msra.mxu0 0.0
    %664 = vmatprep.subr.mxu0 0.0
    %665 = vmatpush2.msra.mxu0 0.0
    %666 = vmatprep.subr.mxu0 0.0
    %667 = vmatpush2.msra.mxu0 0.0
    %668 = vmatprep.subr.mxu0 0.0
    %669 = vmatpush2.msra.mxu0 0.0
    %670 = vmatprep.subr.mxu0 0.0
    %671 = vmatpush2.msra.mxu0 0.0
    %672 = vmatprep.subr.mxu0 0.0
    %673 = vmatpush2.msra.mxu0 0.0
    %674 = vmatprep.subr.mxu0 0.0
    %675 = vmatpush2.msra.mxu0 0.0
    %676 = vmatprep.subr.mxu0 0.0
    %677 = vmatpush2.msra.mxu0 0.0
    %678 = vmatprep.subr.mxu0 0.0
    %679 = vmatpush2.msra.mxu0 0.0
    %680 = vmatprep.subr.mxu0 0.0
    %681 = vmatpush2.msra.mxu0 0.0
    %682 = vmatprep.subr.mxu0 0.0
    %683 = vmatpush2.msra.mxu0 0.0
    %684 = vmatprep.subr.mxu0 0.0
    %685 = vmatpush2.msra.mxu0 0.0
    %686 = vmatprep.subr.mxu0 0.0
    %687 = vmatpush2.msra.mxu0 0.0
    %688 = vmatprep.mubr.f32.mxu0 0.0
    %v689 = vand.u32 %v611, 4294901760
    %v690 = vsub.f32 %v611, %v689
    %v691 = vand.u32 %v690, 4294901760
    %v692 = vsub.f32 %v690, %v691
    %v693 = vand.u32 %v692, 4294901760
    %694 = vmatmul.mubr.f32.gmra.mxu0 %v693
    %v695 = vpop.f32.mrf.mxu0
    %v696 = vadd.f32 0.0, %v695
    %v697 = vpop.f32.mrf.mxu0
    %698 = vdwg.mxu0
    %699 = vmatprep.subr.mxu0 0.0
    %700 = vmatpush1.msra.mxu0 0.0
    %701 = vmatprep.subr.mxu0 0.0
    %702 = vmatpush1.msra.mxu0 0.0
    %703 = vmatprep.subr.mxu0 0.0
    %704 = vmatpush1.msra.mxu0 0.0
    %705 = vmatprep.subr.mxu0 0.0
    %706 = vmatpush1.msra.mxu0 0.0
    %707 = vmatprep.subr.mxu0 0.0
    %708 = vmatpush1.msra.mxu0 0.0
    %709 = vmatprep.subr.mxu0 0.0
    %v710 = vand.u32 %v608, 4294901760
    %v711 = vsub.f32 %v608, %v710
    %v712 = vand.u32 %v711, 4294901760
    %v713 = vsub.f32 %v711, %v712
    %v714 = vand.u32 %v713, 4294901760
    %715 = vmatpush1.msra.mxu0 %v714
    %716 = vmatprep.subr.mxu0 0.0
    %v717 = vand.u32 %v607, 4294901760
    %v718 = vsub.f32 %v607, %v717
    %v719 = vand.u32 %v718, 4294901760
    %v720 = vsub.f32 %v718, %v719
    %v721 = vand.u32 %v720, 4294901760
    %722 = vmatpush1.msra.mxu0 %v721
    %723 = vmatprep.subr.mxu0 0.0
    %v724 = vand.u32 %v606, 4294901760
    %v725 = vsub.f32 %v606, %v724
    %v726 = vand.u32 %v725, 4294901760
    %v727 = vsub.f32 %v725, %v726
    %v728 = vand.u32 %v727, 4294901760
    %729 = vmatpush1.msra.mxu0 %v728
    %730 = vmatprep.subr.mxu0 0.0
    %v731 = vand.u32 %v605, 4294901760
    %v732 = vsub.f32 %v605, %v731
    %v733 = vand.u32 %v732, 4294901760
    %v734 = vsub.f32 %v732, %v733
    %v735 = vand.u32 %v734, 4294901760
    %736 = vmatpush1.msra.mxu0 %v735
    %737 = vmatprep.subr.mxu0 0.0
    %v738 = vand.u32 %v604, 4294901760
    %v739 = vsub.f32 %v604, %v738
    %v740 = vand.u32 %v739, 4294901760
    %v741 = vsub.f32 %v739, %v740
    %v742 = vand.u32 %v741, 4294901760
    %743 = vmatpush1.msra.mxu0 %v742
    %744 = vmatprep.subr.mxu0 0.0
    %v745 = vand.u32 %v603, 4294901760
    %v746 = vsub.f32 %v603, %v745
    %v747 = vand.u32 %v746, 4294901760
    %v748 = vsub.f32 %v746, %v747
    %v749 = vand.u32 %v748, 4294901760
    %750 = vmatpush1.msra.mxu0 %v749
    %751 = vmatprep.subr.mxu0 0.0
    %v752 = vand.u32 %v602, 4294901760
    %v753 = vsub.f32 %v602, %v752
    %v754 = vand.u32 %v753, 4294901760
    %v755 = vsub.f32 %v753, %v754
    %v756 = vand.u32 %v755, 4294901760
    %757 = vmatpush1.msra.mxu0 %v756
    %758 = vmatprep.subr.mxu0 0.0
    %v759 = vand.u32 %v601, 4294901760
    %v760 = vsub.f32 %v601, %v759
    %v761 = vand.u32 %v760, 4294901760
    %v762 = vsub.f32 %v760, %v761
    %v763 = vand.u32 %v762, 4294901760
    %764 = vmatpush1.msra.mxu0 %v763
    %765 = vmatprep.subr.mxu0 0.0
    %v766 = vand.u32 %v600, 4294901760
    %v767 = vsub.f32 %v600, %v766
    %v768 = vand.u32 %v767, 4294901760
    %v769 = vsub.f32 %v767, %v768
    %v770 = vand.u32 %v769, 4294901760
    %771 = vmatpush1.msra.mxu0 %v770
    %772 = vmatprep.subr.mxu0 0.0
    %v773 = vand.u32 %v599, 4294901760
    %v774 = vsub.f32 %v599, %v773
    %v775 = vand.u32 %v774, 4294901760
    %v776 = vsub.f32 %v774, %v775
    %v777 = vand.u32 %v776, 4294901760
    %778 = vmatpush1.msra.mxu0 %v777
    %779 = vmatprep.subr.mxu0 0.0
    %v780 = vand.u32 %v598, 4294901760
    %v781 = vsub.f32 %v598, %v780
    %v782 = vand.u32 %v781, 4294901760
    %v783 = vsub.f32 %v781, %v782
    %v784 = vand.u32 %v783, 4294901760
    %785 = vmatpush1.msra.mxu0 %v784
    %786 = vmatprep.subr.mxu0 0.0
    %787 = vmatpush2.msra.mxu0 0.0
    %788 = vmatprep.subr.mxu0 0.0
    %789 = vmatpush2.msra.mxu0 0.0
    %790 = vmatprep.subr.mxu0 0.0
    %791 = vmatpush2.msra.mxu0 0.0
    %792 = vmatprep.subr.mxu0 0.0
    %793 = vmatpush2.msra.mxu0 0.0
    %794 = vmatprep.subr.mxu0 0.0
    %795 = vmatpush2.msra.mxu0 0.0
    %796 = vmatprep.subr.mxu0 0.0
    %797 = vmatpush2.msra.mxu0 0.0
    %798 = vmatprep.subr.mxu0 0.0
    %799 = vmatpush2.msra.mxu0 0.0
    %800 = vmatprep.subr.mxu0 0.0
    %801 = vmatpush2.msra.mxu0 0.0
    %802 = vmatprep.subr.mxu0 0.0
    %803 = vmatpush2.msra.mxu0 0.0
    %804 = vmatprep.subr.mxu0 0.0
    %805 = vmatpush2.msra.mxu0 0.0
    %806 = vmatprep.subr.mxu0 0.0
    %807 = vmatpush2.msra.mxu0 0.0
    %808 = vmatprep.subr.mxu0 0.0
    %809 = vmatpush2.msra.mxu0 0.0
    %810 = vmatprep.subr.mxu0 0.0
    %811 = vmatpush2.msra.mxu0 0.0
    %812 = vmatprep.subr.mxu0 0.0
    %813 = vmatpush2.msra.mxu0 0.0
    %814 = vmatprep.subr.mxu0 0.0
    %815 = vmatpush2.msra.mxu0 0.0
    %816 = vmatprep.subr.mxu0 0.0
    %817 = vmatpush2.msra.mxu0 0.0
    %818 = vmatprep.mubr.f32.mxu0 0.0
    %v819 = vand.u32 %v611, 4294901760
    %820 = vmatmul.mubr.f32.gmra.mxu0 %v819
    %v821 = vpop.f32.mrf.mxu0
    %v822 = vadd.f32 %v696, %v821
    %v823 = vpop.f32.mrf.mxu0
    %824 = vdwg.mxu0
    %825 = vmatprep.subr.mxu0 0.0
    %826 = vmatpush1.msra.mxu0 0.0
    %827 = vmatprep.subr.mxu0 0.0
    %828 = vmatpush1.msra.mxu0 0.0
    %829 = vmatprep.subr.mxu0 0.0
    %830 = vmatpush1.msra.mxu0 0.0
    %831 = vmatprep.subr.mxu0 0.0
    %832 = vmatpush1.msra.mxu0 0.0
    %833 = vmatprep.subr.mxu0 0.0
    %834 = vmatpush1.msra.mxu0 0.0
    %835 = vmatprep.subr.mxu0 0.0
    %v836 = vand.u32 %v608, 4294901760
    %v837 = vsub.f32 %v608, %v836
    %838 = vmatpush1.msra.mxu0 %v837
    %839 = vmatprep.subr.mxu0 0.0
    %v840 = vand.u32 %v607, 4294901760
    %v841 = vsub.f32 %v607, %v840
    %842 = vmatpush1.msra.mxu0 %v841
    %843 = vmatprep.subr.mxu0 0.0
    %v844 = vand.u32 %v606, 4294901760
    %v845 = vsub.f32 %v606, %v844
    %846 = vmatpush1.msra.mxu0 %v845
    %847 = vmatprep.subr.mxu0 0.0
    %v848 = vand.u32 %v605, 4294901760
    %v849 = vsub.f32 %v605, %v848
    %850 = vmatpush1.msra.mxu0 %v849
    %851 = vmatprep.subr.mxu0 0.0
    %v852 = vand.u32 %v604, 4294901760
    %v853 = vsub.f32 %v604, %v852
    %854 = vmatpush1.msra.mxu0 %v853
    %855 = vmatprep.subr.mxu0 0.0
    %v856 = vand.u32 %v603, 4294901760
    %v857 = vsub.f32 %v603, %v856
    %858 = vmatpush1.msra.mxu0 %v857
    %859 = vmatprep.subr.mxu0 0.0
    %v860 = vand.u32 %v602, 4294901760
    %v861 = vsub.f32 %v602, %v860
    %862 = vmatpush1.msra.mxu0 %v861
    %863 = vmatprep.subr.mxu0 0.0
    %v864 = vand.u32 %v601, 4294901760
    %v865 = vsub.f32 %v601, %v864
    %866 = vmatpush1.msra.mxu0 %v865
    %867 = vmatprep.subr.mxu0 0.0
    %v868 = vand.u32 %v600, 4294901760
    %v869 = vsub.f32 %v600, %v868
    %870 = vmatpush1.msra.mxu0 %v869
    %871 = vmatprep.subr.mxu0 0.0
    %v872 = vand.u32 %v599, 4294901760
    %v873 = vsub.f32 %v599, %v872
    %874 = vmatpush1.msra.mxu0 %v873
    %875 = vmatprep.subr.mxu0 0.0
    %v876 = vand.u32 %v598, 4294901760
    %v877 = vsub.f32 %v598, %v876
    %878 = vmatpush1.msra.mxu0 %v877
    %879 = vmatprep.subr.mxu0 0.0
    %880 = vmatpush2.msra.mxu0 0.0
    %881 = vmatprep.subr.mxu0 0.0
    %882 = vmatpush2.msra.mxu0 0.0
    %883 = vmatprep.subr.mxu0 0.0
    %884 = vmatpush2.msra.mxu0 0.0
    %885 = vmatprep.subr.mxu0 0.0
    %886 = vmatpush2.msra.mxu0 0.0
    %887 = vmatprep.subr.mxu0 0.0
    %888 = vmatpush2.msra.mxu0 0.0
    %889 = vmatprep.subr.mxu0 0.0
    %890 = vmatpush2.msra.mxu0 0.0
    %891 = vmatprep.subr.mxu0 0.0
    %892 = vmatpush2.msra.mxu0 0.0
    %893 = vmatprep.subr.mxu0 0.0
    %894 = vmatpush2.msra.mxu0 0.0
    %895 = vmatprep.subr.mxu0 0.0
    %896 = vmatpush2.msra.mxu0 0.0
    %897 = vmatprep.subr.mxu0 0.0
    %898 = vmatpush2.msra.mxu0 0.0
    %899 = vmatprep.subr.mxu0 0.0
    %900 = vmatpush2.msra.mxu0 0.0
    %901 = vmatprep.subr.mxu0 0.0
    %902 = vmatpush2.msra.mxu0 0.0
    %903 = vmatprep.subr.mxu0 0.0
    %904 = vmatpush2.msra.mxu0 0.0
    %905 = vmatprep.subr.mxu0 0.0
    %906 = vmatpush2.msra.mxu0 0.0
    %907 = vmatprep.subr.mxu0 0.0
    %908 = vmatpush2.msra.mxu0 0.0
    %909 = vmatprep.subr.mxu0 0.0
    %910 = vmatpush2.msra.mxu0 0.0
    %911 = vmatprep.mubr.f32.mxu0 0.0
    %v912 = vand.u32 %v611, 4294901760
    %v913 = vsub.f32 %v611, %v912
    %914 = vmatmul.mubr.f32.gmra.mxu0 %v913
    %v915 = vpop.f32.mrf.mxu0
    %v916 = vadd.f32 %v822, %v915
    %v917 = vpop.f32.mrf.mxu0
    %918 = vdwg.mxu0
    %919 = vmatprep.subr.mxu0 0.0
    %920 = vmatpush1.msra.mxu0 0.0
    %921 = vmatprep.subr.mxu0 0.0
    %922 = vmatpush1.msra.mxu0 0.0
    %923 = vmatprep.subr.mxu0 0.0
    %924 = vmatpush1.msra.mxu0 0.0
    %925 = vmatprep.subr.mxu0 0.0
    %926 = vmatpush1.msra.mxu0 0.0
    %927 = vmatprep.subr.mxu0 0.0
    %928 = vmatpush1.msra.mxu0 0.0
    %929 = vmatprep.subr.mxu0 0.0
    %v930 = vand.u32 %v608, 4294901760
    %931 = vmatpush1.msra.mxu0 %v930
    %932 = vmatprep.subr.mxu0 0.0
    %v933 = vand.u32 %v607, 4294901760
    %934 = vmatpush1.msra.mxu0 %v933
    %935 = vmatprep.subr.mxu0 0.0
    %v936 = vand.u32 %v606, 4294901760
    %937 = vmatpush1.msra.mxu0 %v936
    %938 = vmatprep.subr.mxu0 0.0
    %v939 = vand.u32 %v605, 4294901760
    %940 = vmatpush1.msra.mxu0 %v939
    %941 = vmatprep.subr.mxu0 0.0
    %v942 = vand.u32 %v604, 4294901760
    %943 = vmatpush1.msra.mxu0 %v942
    %944 = vmatprep.subr.mxu0 0.0
    %v945 = vand.u32 %v603, 4294901760
    %946 = vmatpush1.msra.mxu0 %v945
    %947 = vmatprep.subr.mxu0 0.0
    %v948 = vand.u32 %v602, 4294901760
    %949 = vmatpush1.msra.mxu0 %v948
    %950 = vmatprep.subr.mxu0 0.0
    %v951 = vand.u32 %v601, 4294901760
    %952 = vmatpush1.msra.mxu0 %v951
    %953 = vmatprep.subr.mxu0 0.0
    %v954 = vand.u32 %v600, 4294901760
    %955 = vmatpush1.msra.mxu0 %v954
    %956 = vmatprep.subr.mxu0 0.0
    %v957 = vand.u32 %v599, 4294901760
    %958 = vmatpush1.msra.mxu0 %v957
    %959 = vmatprep.subr.mxu0 0.0
    %v960 = vand.u32 %v598, 4294901760
    %961 = vmatpush1.msra.mxu0 %v960
    %962 = vmatprep.subr.mxu0 0.0
    %963 = vmatpush2.msra.mxu0 0.0
    %964 = vmatprep.subr.mxu0 0.0
    %965 = vmatpush2.msra.mxu0 0.0
    %966 = vmatprep.subr.mxu0 0.0
    %967 = vmatpush2.msra.mxu0 0.0
    %968 = vmatprep.subr.mxu0 0.0
    %969 = vmatpush2.msra.mxu0 0.0
    %970 = vmatprep.subr.mxu0 0.0
    %971 = vmatpush2.msra.mxu0 0.0
    %972 = vmatprep.subr.mxu0 0.0
    %973 = vmatpush2.msra.mxu0 0.0
    %974 = vmatprep.subr.mxu0 0.0
    %975 = vmatpush2.msra.mxu0 0.0
    %976 = vmatprep.subr.mxu0 0.0
    %977 = vmatpush2.msra.mxu0 0.0
    %978 = vmatprep.subr.mxu0 0.0
    %979 = vmatpush2.msra.mxu0 0.0
    %980 = vmatprep.subr.mxu0 0.0
    %981 = vmatpush2.msra.mxu0 0.0
    %982 = vmatprep.subr.mxu0 0.0
    %983 = vmatpush2.msra.mxu0 0.0
    %984 = vmatprep.subr.mxu0 0.0
    %985 = vmatpush2.msra.mxu0 0.0
    %986 = vmatprep.subr.mxu0 0.0
    %987 = vmatpush2.msra.mxu0 0.0
    %988 = vmatprep.subr.mxu0 0.0
    %989 = vmatpush2.msra.mxu0 0.0
    %990 = vmatprep.subr.mxu0 0.0
    %991 = vmatpush2.msra.mxu0 0.0
    %992 = vmatprep.subr.mxu0 0.0
    %993 = vmatpush2.msra.mxu0 0.0
    %994 = vmatprep.mubr.f32.mxu0 0.0
    %v995 = vand.u32 %v611, 4294901760
    %v996 = vsub.f32 %v611, %v995
    %v997 = vand.u32 %v996, 4294901760
    %998 = vmatmul.mubr.f32.gmra.mxu0 %v997
    %v999 = vpop.f32.mrf.mxu0
    %v1000 = vadd.f32 %v916, %v999
    %v1001 = vpop.f32.mrf.mxu0
    %1002 = vdwg.mxu0
    %1003 = vmatprep.subr.mxu0 0.0
    %1004 = vmatpush1.msra.mxu0 0.0
    %1005 = vmatprep.subr.mxu0 0.0
    %1006 = vmatpush1.msra.mxu0 0.0
    %1007 = vmatprep.subr.mxu0 0.0
    %1008 = vmatpush1.msra.mxu0 0.0
    %1009 = vmatprep.subr.mxu0 0.0
    %1010 = vmatpush1.msra.mxu0 0.0
    %1011 = vmatprep.subr.mxu0 0.0
    %1012 = vmatpush1.msra.mxu0 0.0
    %1013 = vmatprep.subr.mxu0 0.0
    %v1014 = vand.u32 %v608, 4294901760
    %v1015 = vsub.f32 %v608, %v1014
    %v1016 = vand.u32 %v1015, 4294901760
    %1017 = vmatpush1.msra.mxu0 %v1016
    %1018 = vmatprep.subr.mxu0 0.0
    %v1019 = vand.u32 %v607, 4294901760
    %v1020 = vsub.f32 %v607, %v1019
    %v1021 = vand.u32 %v1020, 4294901760
    %1022 = vmatpush1.msra.mxu0 %v1021
    %1023 = vmatprep.subr.mxu0 0.0
    %v1024 = vand.u32 %v606, 4294901760
    %v1025 = vsub.f32 %v606, %v1024
    %v1026 = vand.u32 %v1025, 4294901760
    %1027 = vmatpush1.msra.mxu0 %v1026
    %1028 = vmatprep.subr.mxu0 0.0
    %v1029 = vand.u32 %v605, 4294901760
    %v1030 = vsub.f32 %v605, %v1029
    %v1031 = vand.u32 %v1030, 4294901760
    %1032 = vmatpush1.msra.mxu0 %v1031
    %1033 = vmatprep.subr.mxu0 0.0
    %v1034 = vand.u32 %v604, 4294901760
    %v1035 = vsub.f32 %v604, %v1034
    %v1036 = vand.u32 %v1035, 4294901760
    %1037 = vmatpush1.msra.mxu0 %v1036
    %1038 = vmatprep.subr.mxu0 0.0
    %v1039 = vand.u32 %v603, 4294901760
    %v1040 = vsub.f32 %v603, %v1039
    %v1041 = vand.u32 %v1040, 4294901760
    %1042 = vmatpush1.msra.mxu0 %v1041
    %1043 = vmatprep.subr.mxu0 0.0
    %v1044 = vand.u32 %v602, 4294901760
    %v1045 = vsub.f32 %v602, %v1044
    %v1046 = vand.u32 %v1045, 4294901760
    %1047 = vmatpush1.msra.mxu0 %v1046
    %1048 = vmatprep.subr.mxu0 0.0
    %v1049 = vand.u32 %v601, 4294901760
    %v1050 = vsub.f32 %v601, %v1049
    %v1051 = vand.u32 %v1050, 4294901760
    %1052 = vmatpush1.msra.mxu0 %v1051
    %1053 = vmatprep.subr.mxu0 0.0
    %v1054 = vand.u32 %v600, 4294901760
    %v1055 = vsub.f32 %v600, %v1054
    %v1056 = vand.u32 %v1055, 4294901760
    %1057 = vmatpush1.msra.mxu0 %v1056
    %1058 = vmatprep.subr.mxu0 0.0
    %v1059 = vand.u32 %v599, 4294901760
    %v1060 = vsub.f32 %v599, %v1059
    %v1061 = vand.u32 %v1060, 4294901760
    %1062 = vmatpush1.msra.mxu0 %v1061
    %1063 = vmatprep.subr.mxu0 0.0
    %v1064 = vand.u32 %v598, 4294901760
    %v1065 = vsub.f32 %v598, %v1064
    %v1066 = vand.u32 %v1065, 4294901760
    %1067 = vmatpush1.msra.mxu0 %v1066
    %1068 = vmatprep.subr.mxu0 0.0
    %1069 = vmatpush2.msra.mxu0 0.0
    %1070 = vmatprep.subr.mxu0 0.0
    %1071 = vmatpush2.msra.mxu0 0.0
    %1072 = vmatprep.subr.mxu0 0.0
    %1073 = vmatpush2.msra.mxu0 0.0
    %1074 = vmatprep.subr.mxu0 0.0
    %1075 = vmatpush2.msra.mxu0 0.0
    %1076 = vmatprep.subr.mxu0 0.0
    %1077 = vmatpush2.msra.mxu0 0.0
    %1078 = vmatprep.subr.mxu0 0.0
    %1079 = vmatpush2.msra.mxu0 0.0
    %1080 = vmatprep.subr.mxu0 0.0
    %1081 = vmatpush2.msra.mxu0 0.0
    %1082 = vmatprep.subr.mxu0 0.0
    %1083 = vmatpush2.msra.mxu0 0.0
    %1084 = vmatprep.subr.mxu0 0.0
    %1085 = vmatpush2.msra.mxu0 0.0
    %1086 = vmatprep.subr.mxu0 0.0
    %1087 = vmatpush2.msra.mxu0 0.0
    %1088 = vmatprep.subr.mxu0 0.0
    %1089 = vmatpush2.msra.mxu0 0.0
    %1090 = vmatprep.subr.mxu0 0.0
    %1091 = vmatpush2.msra.mxu0 0.0
    %1092 = vmatprep.subr.mxu0 0.0
    %1093 = vmatpush2.msra.mxu0 0.0
    %1094 = vmatprep.subr.mxu0 0.0
    %1095 = vmatpush2.msra.mxu0 0.0
    %1096 = vmatprep.subr.mxu0 0.0
    %1097 = vmatpush2.msra.mxu0 0.0
    %1098 = vmatprep.subr.mxu0 0.0
    %1099 = vmatpush2.msra.mxu0 0.0
    %1100 = vmatprep.mubr.f32.mxu0 0.0
    %v1101 = vand.u32 %v611, 4294901760
    %1102 = vmatmul.mubr.f32.gmra.mxu0 %v1101
    %v1103 = vpop.f32.mrf.mxu0
    %v1104 = vadd.f32 %v1000, %v1103
    %v1105 = vpop.f32.mrf.mxu0
    %1106 = vdwg.mxu0
    %1107 = vmatprep.subr.mxu0 0.0
    %1108 = vmatpush1.msra.mxu0 0.0
    %1109 = vmatprep.subr.mxu0 0.0
    %1110 = vmatpush1.msra.mxu0 0.0
    %1111 = vmatprep.subr.mxu0 0.0
    %1112 = vmatpush1.msra.mxu0 0.0
    %1113 = vmatprep.subr.mxu0 0.0
    %1114 = vmatpush1.msra.mxu0 0.0
    %1115 = vmatprep.subr.mxu0 0.0
    %1116 = vmatpush1.msra.mxu0 0.0
    %1117 = vmatprep.subr.mxu0 0.0
    %v1118 = vand.u32 %v608, 4294901760
    %1119 = vmatpush1.msra.mxu0 %v1118
    %1120 = vmatprep.subr.mxu0 0.0
    %v1121 = vand.u32 %v607, 4294901760
    %1122 = vmatpush1.msra.mxu0 %v1121
    %1123 = vmatprep.subr.mxu0 0.0
    %v1124 = vand.u32 %v606, 4294901760
    %1125 = vmatpush1.msra.mxu0 %v1124
    %1126 = vmatprep.subr.mxu0 0.0
    %v1127 = vand.u32 %v605, 4294901760
    %1128 = vmatpush1.msra.mxu0 %v1127
    %1129 = vmatprep.subr.mxu0 0.0
    %v1130 = vand.u32 %v604, 4294901760
    %1131 = vmatpush1.msra.mxu0 %v1130
    %1132 = vmatprep.subr.mxu0 0.0
    %v1133 = vand.u32 %v603, 4294901760
    %1134 = vmatpush1.msra.mxu0 %v1133
    %1135 = vmatprep.subr.mxu0 0.0
    %v1136 = vand.u32 %v602, 4294901760
    %1137 = vmatpush1.msra.mxu0 %v1136
    %1138 = vmatprep.subr.mxu0 0.0
    %v1139 = vand.u32 %v601, 4294901760
    %1140 = vmatpush1.msra.mxu0 %v1139
    %1141 = vmatprep.subr.mxu0 0.0
    %v1142 = vand.u32 %v600, 4294901760
    %1143 = vmatpush1.msra.mxu0 %v1142
    %1144 = vmatprep.subr.mxu0 0.0
    %v1145 = vand.u32 %v599, 4294901760
    %1146 = vmatpush1.msra.mxu0 %v1145
    %1147 = vmatprep.subr.mxu0 0.0
    %v1148 = vand.u32 %v598, 4294901760
    %1149 = vmatpush1.msra.mxu0 %v1148
    %1150 = vmatprep.subr.mxu0 0.0
    %1151 = vmatpush2.msra.mxu0 0.0
    %1152 = vmatprep.subr.mxu0 0.0
    %1153 = vmatpush2.msra.mxu0 0.0
    %1154 = vmatprep.subr.mxu0 0.0
    %1155 = vmatpush2.msra.mxu0 0.0
    %1156 = vmatprep.subr.mxu0 0.0
    %1157 = vmatpush2.msra.mxu0 0.0
    %1158 = vmatprep.subr.mxu0 0.0
    %1159 = vmatpush2.msra.mxu0 0.0
    %1160 = vmatprep.subr.mxu0 0.0
    %1161 = vmatpush2.msra.mxu0 0.0
    %1162 = vmatprep.subr.mxu0 0.0
    %1163 = vmatpush2.msra.mxu0 0.0
    %1164 = vmatprep.subr.mxu0 0.0
    %1165 = vmatpush2.msra.mxu0 0.0
    %1166 = vmatprep.subr.mxu0 0.0
    %1167 = vmatpush2.msra.mxu0 0.0
    %1168 = vmatprep.subr.mxu0 0.0
    %1169 = vmatpush2.msra.mxu0 0.0
    %1170 = vmatprep.subr.mxu0 0.0
    %1171 = vmatpush2.msra.mxu0 0.0
    %1172 = vmatprep.subr.mxu0 0.0
    %1173 = vmatpush2.msra.mxu0 0.0
    %1174 = vmatprep.subr.mxu0 0.0
    %1175 = vmatpush2.msra.mxu0 0.0
    %1176 = vmatprep.subr.mxu0 0.0
    %1177 = vmatpush2.msra.mxu0 0.0
    %1178 = vmatprep.subr.mxu0 0.0
    %1179 = vmatpush2.msra.mxu0 0.0
    %1180 = vmatprep.subr.mxu0 0.0
    %1181 = vmatpush2.msra.mxu0 0.0
    %1182 = vmatprep.mubr.f32.mxu0 0.0
    %v1183 = vand.u32 %v611, 4294901760
    %1184 = vmatmul.mubr.f32.gmra.mxu0 %v1183
    %v1185 = vpop.f32.mrf.mxu0
    %v1186 = vadd.f32 %v1104, %v1185
    %v1187 = vpop.f32.mrf.mxu0
    %1188 = vdwg.mxu0
    %v1189 = vmax.f32 %v1186, 0.0
    %v1190 = vmul.f32 %v1189, %v545
    %v1191 = vmax.f32 %v545, 0.0
    %v1192 = vld [vmem:[%s5] sm:$0x1]
    %v1194 = vlaneseq
    %v1195 = vshrl.u32 %v1194, 7
    %v1196 = vsub.s32 0, %v1195
    %v1197 = vrot.slane %v1192, %v1196
    %v1199 = vmul.f32 %v1191, %v1197
    %v1200 = vadd.f32 %v1190, %v1199
    %vm1201 = vcmask 1041408
    %v1202 = vsel %vm1201, %v1200, 0.0
    %1203 = vadd.xlane.f32.xlu0 %v1202
    %v1204 = vpop.xlane.xlu0 %1203
    %vm1205 = vcmask 1024
    %1206 = vst.msk [vmem:[%s6] sm:$0x3] %vm1205, %v1204
    // Predicated region
    $region42: #{tpu_custom_call.1} parent=1 // pred_check
      _
    $region43: #{tpu_custom_call.1} parent=1 // pred_check_branch
      %1208 = sbr.rel (0) target = $region45
    $region44: #{tpu_custom_call.1} parent=1 // pred_region
      _
    $region45: #{tpu_custom_call.1} parent=1 // pred_fallthru
      _
    // Predicated region
    $region46: #{tpu_custom_call.1} parent=1 // pred_check
      _
    $region47: #{tpu_custom_call.1} parent=1 // pred_check_branch
      %1210 = sbr.rel (0) target = $region49
    $region48: #{tpu_custom_call.1} parent=1 // pred_region
      _
    $region49: #{tpu_custom_call.1} parent=1 // pred_fallthru
      _
    %1211 = vsyncpa [#allocation3], 1
    %1212 = vsyncpa [#allocation5], 1
    %1213 = vsyncpa [#allocation8], 1

</llo_original>
